<compile_context>
chip_gen: v7x
topology: tpu7x:2x2x1
jax: 0.10.0
libtpu: 0.0.40
codegen_flags: <defaults>
</compile_context>

<pallas_src>
import jax
import jax.numpy as jnp
from jax import lax
from jax.experimental import pallas as pl
from jax.experimental.pallas import tpu as pltpu


def _round_up(x, m):
    return ((x + m - 1) // m) * m


def spr_kernel(idx_ref, m2d_ref, a2d_ref, R_ref, out_ref, m2d_s, r_s):
    """One grid step processes b_tile users.

    idx_ref : (B_pad,) int32 in SMEM (scalar-prefetched user indices)
    m2d_ref : (U, D) f32 user-latent table, resident in VMEM
    a2d_ref : (M, D) f32 item-latent table, resident in VMEM (not transposed)
    R_ref   : (U, M) f32 rating table, resident in VMEM
    out_ref : (b_tile, M) f32 output block
    m2d_s   : (b_tile, D) f32 scratch (gathered m2d rows)
    r_s     : (b_tile, M) f32 scratch (gathered R rows)
    """
    bt = out_ref.shape[0]
    base = pl.program_id(0) * bt

    # Fused embedding gather: read user ids from SMEM, dynamic-slice the
    # matching rows out of the resident tables straight into VMEM scratch.
    def gather_row(j, carry):
        u = idx_ref[base + j]
        m2d_s[pl.ds(j, 1), :] = m2d_ref[pl.ds(u, 1), :]
        r_s[pl.ds(j, 1), :] = R_ref[pl.ds(u, 1), :]
        return carry

    lax.fori_loop(0, bt, gather_row, 0, unroll=bt <= 16)

    # m2d @ a2d.T without any host-side transpose: contract D against D.
    s = lax.dot_general(
        m2d_s[...], a2d_ref[...],
        dimension_numbers=(((1,), (1,)), ((), ())),
        preferred_element_type=jnp.float32)                      # (bt, M)

    # F.normalize(p=2, dim=1, eps=1e-12): v / max(||v||, eps)
    #   == v * rsqrt(max(||v||^2, eps^2));  rsqrt runs on the EUP slot.
    sumsq = jnp.sum(s * s, axis=-1, keepdims=True)
    r = s * lax.rsqrt(jnp.maximum(sumsq, 1e-24)) + r_s[...]

    # Row softmax (numerically stable).
    m = jnp.max(r, axis=-1, keepdims=True)
    e = jnp.exp(r - m)
    denom = jnp.sum(e, axis=-1, keepdims=True)
    # Exact reciprocal keeps f32 parity with the reference; flip approx=True
    # to move the divide fully onto the EUP at large shapes.
    out_ref[...] = (e * pl.reciprocal(denom, approx=False)).astype(out_ref.dtype)


def spr_forward(user_indices, m2d_weight, a2d_weight, R_weight, *, b_tile=None):
    """user_indices: (B,) int32
       m2d_weight:   (U, D) f32
       a2d_weight:   (M, D) f32   (PyTorch Embedding weight; NOT transposed)
       R_weight:     (U, M) f32
    """
    B = user_indices.shape[0]
    U, D = m2d_weight.shape
    M = a2d_weight.shape[0]

    if b_tile is None:
        b_tile = min(_round_up(B, 8), 128)   # multi-step grid at realistic B
    b_tile = _round_up(b_tile, 8)

    B_pad = _round_up(B, b_tile)
    idx = user_indices.astype(jnp.int32)
    if B_pad != B:
        idx = jnp.pad(idx, (0, B_pad - B))   # pad with user 0 (valid row)
    grid = (B_pad // b_tile,)

    # NOTE(v6e/v7x): casting m2d/a2d operands to bf16 (accumulating in f32)
    # halves operand HBM traffic and unlocks MXU bf16 peak; kept f32 here to
    # match the f32 reference bit-for-bit within tolerance.
    out = pl.pallas_call(
        spr_kernel,
        out_shape=jax.ShapeDtypeStruct((B_pad, M), jnp.float32),
        grid_spec=pltpu.PrefetchScalarGridSpec(
            num_scalar_prefetch=1,
            grid=grid,
            in_specs=[
                pl.BlockSpec((U, D), lambda i, idx_ref: (0, 0)),   # m2d table (resident)
                pl.BlockSpec((M, D), lambda i, idx_ref: (0, 0)),   # a2d weight (resident)
                pl.BlockSpec((U, M), lambda i, idx_ref: (0, 0)),   # R table (resident)
            ],
            out_specs=pl.BlockSpec((b_tile, M), lambda i, idx_ref: (i, 0)),
            scratch_shapes=[
                pltpu.VMEM((b_tile, D), jnp.float32),
                pltpu.VMEM((b_tile, M), jnp.float32),
            ],
        ),
        compiler_params=pltpu.CompilerParams(
            dimension_semantics=("parallel",),   # batch axis -> v7x megacore
        ),
    )(idx,
      m2d_weight.astype(jnp.float32),
      a2d_weight.astype(jnp.float32),
      R_weight.astype(jnp.float32))

    return out[:B]


def spr_reference(user_indices, m2d_weight, a2d_weight, R_weight):
    m2d = m2d_weight[user_indices]
    s = m2d @ a2d_weight.T
    norm = jnp.maximum(jnp.sqrt(jnp.sum(s * s, axis=-1, keepdims=True)), 1e-12)
    r = s / norm + R_weight[user_indices]
    return jax.nn.softmax(r, axis=1)


if __name__ == "__main__":
    key = jax.random.PRNGKey(0)
    kU, kA, kR, kI = jax.random.split(key, 4)

    U = 16    # number of users (rows of m2d / R)
    D = 32    # latent dim
    M = 128   # number of items / output dim (rows of a2d weight)
    B = 8     # batch of user indices

    m2d_weight = jax.random.normal(kU, (U, D), dtype=jnp.float32)
    a2d_weight = jax.random.normal(kA, (M, D), dtype=jnp.float32)
    R_weight = jax.random.normal(kR, (U, M), dtype=jnp.float32) * 0.1
    user_indices = jax.random.randint(kI, (B,), 0, U, dtype=jnp.int32)

    out = spr_forward(user_indices, m2d_weight, a2d_weight, R_weight)
    out = jax.block_until_ready(out)

    ref = spr_reference(user_indices, m2d_weight, a2d_weight, R_weight)
    assert out.shape == (B, M)
    assert jnp.allclose(out, ref, atol=2e-5, rtol=2e-5), "mismatch vs reference"
    assert jnp.allclose(jnp.sum(out, axis=-1), 1.0, atol=1e-5), "softmax rows must sum to 1"

    print("KERNEL_OK")
</pallas_src>

<mosaic_0001>
module attributes {stable_mosaic.version = 11 : i64} {
  func.func @spr_kernel(%arg0: i32, %arg1: memref<8xi32, #tpu.memory_space<smem>>, %arg2: memref<16x32xf32, #tpu.memory_space<vmem>>, %arg3: memref<128x32xf32, #tpu.memory_space<vmem>>, %arg4: memref<16x128xf32, #tpu.memory_space<vmem>>, %arg5: memref<8x128xf32, #tpu.memory_space<vmem>>, %arg6: memref<8x32xf32, #tpu.memory_space<vmem>>, %arg7: memref<8x128xf32, #tpu.memory_space<vmem>>) attributes {dimension_semantics = [#tpu.dimension_semantics<parallel>], iteration_bounds = array<i64: 1>, scalar_prefetch = 1 : i64, scratch_operands = 2 : i64, tpu.core_type = #tpu.core_type<tc>, window_params = [{pipeline_mode = #tpu.pipeline_mode<synchronous>, transform_indices = @transform_0, window_bounds = array<i64: 16, 32>}, {pipeline_mode = #tpu.pipeline_mode<synchronous>, transform_indices = @transform_1, window_bounds = array<i64: 128, 32>}, {pipeline_mode = #tpu.pipeline_mode<synchronous>, transform_indices = @transform_2, window_bounds = array<i64: 16, 128>}, {transform_indices = @transform_3, window_bounds = array<i64: 8, 128>}]} {
    %c8_i32 = arith.constant 8 : i32
    %0 = arith.muli %arg0, %c8_i32 : i32
    %c0_i32 = arith.constant 0 : i32
    %1 = arith.addi %0, %c0_i32 : i32
    %2 = arith.index_cast %1 : i32 to index
    %3 = memref.load %arg1[%2] : memref<8xi32, #tpu.memory_space<smem>>
    %4 = arith.index_cast %3 : i32 to index
    %c0 = arith.constant 0 : index
    %5 = vector.load %arg2[%4, %c0] : memref<16x32xf32, #tpu.memory_space<vmem>>, vector<1x32xf32>
    %6 = arith.index_cast %c0_i32 : i32 to index
    %c0_0 = arith.constant 0 : index
    %7 = vector.load %arg6[%6, %c0_0] : memref<8x32xf32, #tpu.memory_space<vmem>>, vector<1x32xf32>
    tpu.vector_store %arg6[%6, %c0_0], %5 {strides = array<i32>} : memref<8x32xf32, #tpu.memory_space<vmem>>, vector<1x32xf32>,
    %8 = arith.index_cast %3 : i32 to index
    %c0_1 = arith.constant 0 : index
    %9 = vector.load %arg4[%8, %c0_1] : memref<16x128xf32, #tpu.memory_space<vmem>>, vector<1x128xf32>
    %10 = arith.index_cast %c0_i32 : i32 to index
    %c0_2 = arith.constant 0 : index
    %11 = vector.load %arg7[%10, %c0_2] : memref<8x128xf32, #tpu.memory_space<vmem>>, vector<1x128xf32>
    tpu.vector_store %arg7[%10, %c0_2], %9 {strides = array<i32>} : memref<8x128xf32, #tpu.memory_space<vmem>>, vector<1x128xf32>,
    %c1_i32 = arith.constant 1 : i32
    %12 = arith.addi %0, %c1_i32 : i32
    %13 = arith.index_cast %12 : i32 to index
    %14 = memref.load %arg1[%13] : memref<8xi32, #tpu.memory_space<smem>>
    %15 = arith.index_cast %14 : i32 to index
    %c0_3 = arith.constant 0 : index
    %16 = vector.load %arg2[%15, %c0_3] : memref<16x32xf32, #tpu.memory_space<vmem>>, vector<1x32xf32>
    %17 = arith.index_cast %c1_i32 : i32 to index
    %c0_4 = arith.constant 0 : index
    %18 = vector.load %arg6[%17, %c0_4] : memref<8x32xf32, #tpu.memory_space<vmem>>, vector<1x32xf32>
    tpu.vector_store %arg6[%17, %c0_4], %16 {strides = array<i32>} : memref<8x32xf32, #tpu.memory_space<vmem>>, vector<1x32xf32>,
    %19 = arith.index_cast %14 : i32 to index
    %c0_5 = arith.constant 0 : index
    %20 = vector.load %arg4[%19, %c0_5] : memref<16x128xf32, #tpu.memory_space<vmem>>, vector<1x128xf32>
    %21 = arith.index_cast %c1_i32 : i32 to index
    %c0_6 = arith.constant 0 : index
    %22 = vector.load %arg7[%21, %c0_6] : memref<8x128xf32, #tpu.memory_space<vmem>>, vector<1x128xf32>
    tpu.vector_store %arg7[%21, %c0_6], %20 {strides = array<i32>} : memref<8x128xf32, #tpu.memory_space<vmem>>, vector<1x128xf32>,
    %c2_i32 = arith.constant 2 : i32
    %23 = arith.addi %0, %c2_i32 : i32
    %24 = arith.index_cast %23 : i32 to index
    %25 = memref.load %arg1[%24] : memref<8xi32, #tpu.memory_space<smem>>
    %26 = arith.index_cast %25 : i32 to index
    %c0_7 = arith.constant 0 : index
    %27 = vector.load %arg2[%26, %c0_7] : memref<16x32xf32, #tpu.memory_space<vmem>>, vector<1x32xf32>
    %28 = arith.index_cast %c2_i32 : i32 to index
    %c0_8 = arith.constant 0 : index
    %29 = vector.load %arg6[%28, %c0_8] : memref<8x32xf32, #tpu.memory_space<vmem>>, vector<1x32xf32>
    tpu.vector_store %arg6[%28, %c0_8], %27 {strides = array<i32>} : memref<8x32xf32, #tpu.memory_space<vmem>>, vector<1x32xf32>,
    %30 = arith.index_cast %25 : i32 to index
    %c0_9 = arith.constant 0 : index
    %31 = vector.load %arg4[%30, %c0_9] : memref<16x128xf32, #tpu.memory_space<vmem>>, vector<1x128xf32>
    %32 = arith.index_cast %c2_i32 : i32 to index
    %c0_10 = arith.constant 0 : index
    %33 = vector.load %arg7[%32, %c0_10] : memref<8x128xf32, #tpu.memory_space<vmem>>, vector<1x128xf32>
    tpu.vector_store %arg7[%32, %c0_10], %31 {strides = array<i32>} : memref<8x128xf32, #tpu.memory_space<vmem>>, vector<1x128xf32>,
    %c3_i32 = arith.constant 3 : i32
    %34 = arith.addi %0, %c3_i32 : i32
    %35 = arith.index_cast %34 : i32 to index
    %36 = memref.load %arg1[%35] : memref<8xi32, #tpu.memory_space<smem>>
    %37 = arith.index_cast %36 : i32 to index
    %c0_11 = arith.constant 0 : index
    %38 = vector.load %arg2[%37, %c0_11] : memref<16x32xf32, #tpu.memory_space<vmem>>, vector<1x32xf32>
    %39 = arith.index_cast %c3_i32 : i32 to index
    %c0_12 = arith.constant 0 : index
    %40 = vector.load %arg6[%39, %c0_12] : memref<8x32xf32, #tpu.memory_space<vmem>>, vector<1x32xf32>
    tpu.vector_store %arg6[%39, %c0_12], %38 {strides = array<i32>} : memref<8x32xf32, #tpu.memory_space<vmem>>, vector<1x32xf32>,
    %41 = arith.index_cast %36 : i32 to index
    %c0_13 = arith.constant 0 : index
    %42 = vector.load %arg4[%41, %c0_13] : memref<16x128xf32, #tpu.memory_space<vmem>>, vector<1x128xf32>
    %43 = arith.index_cast %c3_i32 : i32 to index
    %c0_14 = arith.constant 0 : index
    %44 = vector.load %arg7[%43, %c0_14] : memref<8x128xf32, #tpu.memory_space<vmem>>, vector<1x128xf32>
    tpu.vector_store %arg7[%43, %c0_14], %42 {strides = array<i32>} : memref<8x128xf32, #tpu.memory_space<vmem>>, vector<1x128xf32>,
    %c4_i32 = arith.constant 4 : i32
    %45 = arith.addi %0, %c4_i32 : i32
    %46 = arith.index_cast %45 : i32 to index
    %47 = memref.load %arg1[%46] : memref<8xi32, #tpu.memory_space<smem>>
    %48 = arith.index_cast %47 : i32 to index
    %c0_15 = arith.constant 0 : index
    %49 = vector.load %arg2[%48, %c0_15] : memref<16x32xf32, #tpu.memory_space<vmem>>, vector<1x32xf32>
    %50 = arith.index_cast %c4_i32 : i32 to index
    %c0_16 = arith.constant 0 : index
    %51 = vector.load %arg6[%50, %c0_16] : memref<8x32xf32, #tpu.memory_space<vmem>>, vector<1x32xf32>
    tpu.vector_store %arg6[%50, %c0_16], %49 {strides = array<i32>} : memref<8x32xf32, #tpu.memory_space<vmem>>, vector<1x32xf32>,
    %52 = arith.index_cast %47 : i32 to index
    %c0_17 = arith.constant 0 : index
    %53 = vector.load %arg4[%52, %c0_17] : memref<16x128xf32, #tpu.memory_space<vmem>>, vector<1x128xf32>
    %54 = arith.index_cast %c4_i32 : i32 to index
    %c0_18 = arith.constant 0 : index
    %55 = vector.load %arg7[%54, %c0_18] : memref<8x128xf32, #tpu.memory_space<vmem>>, vector<1x128xf32>
    tpu.vector_store %arg7[%54, %c0_18], %53 {strides = array<i32>} : memref<8x128xf32, #tpu.memory_space<vmem>>, vector<1x128xf32>,
    %c5_i32 = arith.constant 5 : i32
    %56 = arith.addi %0, %c5_i32 : i32
    %57 = arith.index_cast %56 : i32 to index
    %58 = memref.load %arg1[%57] : memref<8xi32, #tpu.memory_space<smem>>
    %59 = arith.index_cast %58 : i32 to index
    %c0_19 = arith.constant 0 : index
    %60 = vector.load %arg2[%59, %c0_19] : memref<16x32xf32, #tpu.memory_space<vmem>>, vector<1x32xf32>
    %61 = arith.index_cast %c5_i32 : i32 to index
    %c0_20 = arith.constant 0 : index
    %62 = vector.load %arg6[%61, %c0_20] : memref<8x32xf32, #tpu.memory_space<vmem>>, vector<1x32xf32>
    tpu.vector_store %arg6[%61, %c0_20], %60 {strides = array<i32>} : memref<8x32xf32, #tpu.memory_space<vmem>>, vector<1x32xf32>,
    %63 = arith.index_cast %58 : i32 to index
    %c0_21 = arith.constant 0 : index
    %64 = vector.load %arg4[%63, %c0_21] : memref<16x128xf32, #tpu.memory_space<vmem>>, vector<1x128xf32>
    %65 = arith.index_cast %c5_i32 : i32 to index
    %c0_22 = arith.constant 0 : index
    %66 = vector.load %arg7[%65, %c0_22] : memref<8x128xf32, #tpu.memory_space<vmem>>, vector<1x128xf32>
    tpu.vector_store %arg7[%65, %c0_22], %64 {strides = array<i32>} : memref<8x128xf32, #tpu.memory_space<vmem>>, vector<1x128xf32>,
    %c6_i32 = arith.constant 6 : i32
    %67 = arith.addi %0, %c6_i32 : i32
    %68 = arith.index_cast %67 : i32 to index
    %69 = memref.load %arg1[%68] : memref<8xi32, #tpu.memory_space<smem>>
    %70 = arith.index_cast %69 : i32 to index
    %c0_23 = arith.constant 0 : index
    %71 = vector.load %arg2[%70, %c0_23] : memref<16x32xf32, #tpu.memory_space<vmem>>, vector<1x32xf32>
    %72 = arith.index_cast %c6_i32 : i32 to index
    %c0_24 = arith.constant 0 : index
    %73 = vector.load %arg6[%72, %c0_24] : memref<8x32xf32, #tpu.memory_space<vmem>>, vector<1x32xf32>
    tpu.vector_store %arg6[%72, %c0_24], %71 {strides = array<i32>} : memref<8x32xf32, #tpu.memory_space<vmem>>, vector<1x32xf32>,
    %74 = arith.index_cast %69 : i32 to index
    %c0_25 = arith.constant 0 : index
    %75 = vector.load %arg4[%74, %c0_25] : memref<16x128xf32, #tpu.memory_space<vmem>>, vector<1x128xf32>
    %76 = arith.index_cast %c6_i32 : i32 to index
    %c0_26 = arith.constant 0 : index
    %77 = vector.load %arg7[%76, %c0_26] : memref<8x128xf32, #tpu.memory_space<vmem>>, vector<1x128xf32>
    tpu.vector_store %arg7[%76, %c0_26], %75 {strides = array<i32>} : memref<8x128xf32, #tpu.memory_space<vmem>>, vector<1x128xf32>,
    %c7_i32 = arith.constant 7 : i32
    %78 = arith.addi %0, %c7_i32 : i32
    %79 = arith.index_cast %78 : i32 to index
    %80 = memref.load %arg1[%79] : memref<8xi32, #tpu.memory_space<smem>>
    %81 = arith.index_cast %80 : i32 to index
    %c0_27 = arith.constant 0 : index
    %82 = vector.load %arg2[%81, %c0_27] : memref<16x32xf32, #tpu.memory_space<vmem>>, vector<1x32xf32>
    %83 = arith.index_cast %c7_i32 : i32 to index
    %c0_28 = arith.constant 0 : index
    %84 = vector.load %arg6[%83, %c0_28] : memref<8x32xf32, #tpu.memory_space<vmem>>, vector<1x32xf32>
    tpu.vector_store %arg6[%83, %c0_28], %82 {strides = array<i32>} : memref<8x32xf32, #tpu.memory_space<vmem>>, vector<1x32xf32>,
    %85 = arith.index_cast %80 : i32 to index
    %c0_29 = arith.constant 0 : index
    %86 = vector.load %arg4[%85, %c0_29] : memref<16x128xf32, #tpu.memory_space<vmem>>, vector<1x128xf32>
    %87 = arith.index_cast %c7_i32 : i32 to index
    %c0_30 = arith.constant 0 : index
    %88 = vector.load %arg7[%87, %c0_30] : memref<8x128xf32, #tpu.memory_space<vmem>>, vector<1x128xf32>
    tpu.vector_store %arg7[%87, %c0_30], %86 {strides = array<i32>} : memref<8x128xf32, #tpu.memory_space<vmem>>, vector<1x128xf32>,
    %c8_i32_31 = arith.constant 8 : i32
    %c0_32 = arith.constant 0 : index
    %c0_33 = arith.constant 0 : index
    %89 = vector.load %arg6[%c0_32, %c0_33] : memref<8x32xf32, #tpu.memory_space<vmem>>, vector<8x32xf32>
    %c0_34 = arith.constant 0 : index
    %c0_35 = arith.constant 0 : index
    %90 = vector.load %arg3[%c0_34, %c0_35] : memref<128x32xf32, #tpu.memory_space<vmem>>, vector<128x32xf32>
    %cst = arith.constant dense<0.000000e+00> : vector<8x128xf32>
    %91 = tpu.matmul %89, %90, %cst {dimension_numbers = #tpu.dot_dimension_numbers<[1], [1], [0], [0], [0, 0, 1, 0], [], []>} : vector<8x32xf32>, vector<128x32xf32>, vector<8x128xf32> -> vector<8x128xf32>
    %92 = arith.mulf %91, %91 : vector<8x128xf32>
    %cst_36 = arith.constant dense<0.000000e+00> : vector<8xf32>
    %93 = vector.multi_reduction <add>, %92, %cst_36 [1] : vector<8x128xf32> to vector<8xf32>
    %94 = vector.shape_cast %93 : vector<8xf32> to vector<8x1xf32>
    %cst_37 = arith.constant 1.000000e-24 : f32
    %95 = vector.broadcast %cst_37 : f32 to vector<8x1xf32>
    %96 = arith.maximumf %94, %95 : vector<8x1xf32>
    %97 = math.rsqrt %96 : vector<8x1xf32>
    %98 = vector.broadcast %97 : vector<8x1xf32> to vector<8x128xf32>
    %99 = arith.mulf %91, %98 : vector<8x128xf32>
    %c0_38 = arith.constant 0 : index
    %c0_39 = arith.constant 0 : index
    %100 = vector.load %arg7[%c0_38, %c0_39] : memref<8x128xf32, #tpu.memory_space<vmem>>, vector<8x128xf32>
    %101 = arith.addf %99, %100 : vector<8x128xf32>
    %cst_40 = arith.constant dense<0xFF800000> : vector<8xf32>
    %102 = vector.multi_reduction <maximumf>, %101, %cst_40 [1] : vector<8x128xf32> to vector<8xf32>
    %103 = vector.shape_cast %102 : vector<8xf32> to vector<8x1xf32>
    %104 = vector.broadcast %103 : vector<8x1xf32> to vector<8x128xf32>
    %105 = arith.subf %101, %104 : vector<8x128xf32>
    %106 = math.exp %105 : vector<8x128xf32>
    %cst_41 = arith.constant dense<0.000000e+00> : vector<8xf32>
    %107 = vector.multi_reduction <add>, %106, %cst_41 [1] : vector<8x128xf32> to vector<8xf32>
    %108 = vector.shape_cast %107 : vector<8xf32> to vector<8x1xf32>
    %109 = tpu.reciprocal %108 : vector<8x1xf32> -> vector<8x1xf32>
    %110 = vector.broadcast %109 : vector<8x1xf32> to vector<8x128xf32>
    %111 = arith.mulf %106, %110 : vector<8x128xf32>
    %c0_42 = arith.constant 0 : index
    %c0_43 = arith.constant 0 : index
    %112 = vector.load %arg5[%c0_42, %c0_43] : memref<8x128xf32, #tpu.memory_space<vmem>>, vector<8x128xf32>
    tpu.vector_store %arg5[%c0_42, %c0_43], %111 {strides = array<i32>} : memref<8x128xf32, #tpu.memory_space<vmem>>, vector<8x128xf32>,
    return
  }
  func.func @transform_0(%arg0: i32, %arg1: memref<8xi32, #tpu.memory_space<smem>>) -> (i32, i32) {
    %c0_i32 = arith.constant 0 : i32
    %c0_i32_0 = arith.constant 0 : i32
    %c0_i32_1 = arith.constant 0 : i32
    return %c0_i32, %c0_i32_0 : i32, i32
  }
  func.func @transform_1(%arg0: i32, %arg1: memref<8xi32, #tpu.memory_space<smem>>) -> (i32, i32) {
    %c0_i32 = arith.constant 0 : i32
    %c0_i32_0 = arith.constant 0 : i32
    %c0_i32_1 = arith.constant 0 : i32
    return %c0_i32, %c0_i32_0 : i32, i32
  }
  func.func @transform_2(%arg0: i32, %arg1: memref<8xi32, #tpu.memory_space<smem>>) -> (i32, i32) {
    %c0_i32 = arith.constant 0 : i32
    %c0_i32_0 = arith.constant 0 : i32
    %c0_i32_1 = arith.constant 0 : i32
    return %c0_i32, %c0_i32_0 : i32, i32
  }
  func.func @transform_3(%arg0: i32, %arg1: memref<8xi32, #tpu.memory_space<smem>>) -> (i32, i32) {
    %c0_i32 = arith.constant 0 : i32
    %c0_i32_0 = arith.constant 0 : i32
    return %arg0, %c0_i32 : i32, i32
  }
}

</mosaic_0001>

<llo_original>
// kernel: tpu_custom_call.1
$region0: #{tpu_custom_call.1}
  #allocation0 [shape = 'u32[]', space=smem, size = 0x4, offset = 0x4, fixed_abs, tag = 'smem constant byte address 0x4 - core index']
  #allocation1 [shape = 'u32[144,128]{1,0:T(1,128)}', space=vmem, size = 0x12000, scoped, tag = 'internal scratch']
  #allocation2 [shape = 'f32[8,32]{1,0:T(8,128)}', space=vmem, size = 0x1000, scoped, tag = 'scratch operand']
  #allocation3 [shape = 'f32[8,128]{1,0:T(8,128)}', space=vmem, size = 0x1000, scoped, tag = 'scratch operand']
  #allocation4 [shape = 's32[1]{0}', space=sflag, size = 0x4, scoped, tag = 'scoped memory for tpu_custom_call.1']
  #allocation5 [shape = 'u8[512]{0}', space=smem, size = 0x200, scoped, tag = 'prefetched SMEM operand 0']
  %s0 = inlined_call_operand.vmem [shape: s32[8], index: 0, kind: input, shape index: {}]
  %s1 = inlined_call_operand.vmem [shape: f32[16,32], index: 1, kind: input, shape index: {}]
  %s2 = inlined_call_operand.vmem [shape: f32[128,32], index: 2, kind: input, shape index: {}]
  %s3 = inlined_call_operand.vmem [shape: f32[16,128], index: 3, kind: input, shape index: {}]
  %s4 = inlined_call_operand.hbm [shape: f32[8,128], index: 4, kind: output, shape index: {}]
  %s5 = sld [smem:[#allocation0]]
  $region22: #{tpu_custom_call.1} parent=0
    _
  %s7 = ssub.s32 1, %s5
  %s8 = scalar_select 0, %s7, %s5
  %s9 = sshll.u32 %s0, 4
  %s10 = int_to_ptr.vmem [resolvable:$true] %s9
  %12 = dma.vmem_to_smem %s10, 16, [#allocation5], [#allocation4]
  %13 = dma.done [#allocation4], 16
  %14 = sfence
  $region1: #{tpu_custom_call.1} parent=0
    #allocation6 [shape = 'u8[4096]{0}', space=vmem, size = 0x1000, scoped, tag = 'output window, operand 0, single buffered']
    #allocation7 [shape = 's32[1]{0}', space=sflag, size = 0x4, scoped, tag = 'scoped memory for tpu_custom_call.1']
    %15 = vsyncpa [#allocation7], 0
    // Predicated region
    $region2: #{tpu_custom_call.1} parent=1 // pred_check
      _
    $region3: #{tpu_custom_call.1} parent=1 // pred_check_branch
      %17 = sbr.rel (0) target = $region5
    $region4: #{tpu_custom_call.1} parent=1 // pred_region
      _
    $region5: #{tpu_custom_call.1} parent=1 // pred_fallthru
      _
    // Predicated region
    $region6: #{tpu_custom_call.1} parent=1 // pred_check
      _
    $region7: #{tpu_custom_call.1} parent=1 // pred_check_branch
      %19 = sbr.rel (0) target = $region9
    $region8: #{tpu_custom_call.1} parent=1 // pred_region
      _
    $region9: #{tpu_custom_call.1} parent=1 // pred_fallthru
      _
    // Predicated region
    $region10: #{tpu_custom_call.1} parent=1 // pred_check
      _
    $region11: #{tpu_custom_call.1} parent=1 // pred_check_branch
      %21 = sbr.rel (0) target = $region13
    $region12: #{tpu_custom_call.1} parent=1 // pred_region
      _
    $region13: #{tpu_custom_call.1} parent=1 // pred_fallthru
      _
    %s22 = smul.u32 0, 8
    %s23 = sld [smem:[#allocation5 + %s22]]
    %s24 = scalar_lea.vmem %s1, %s23
    %v25 = vld [vmem:[%s24] sm:$0x1]
    %vm26 = vcmask 253952
    %27 = vst.msk [vmem:[#allocation2] sm:$0x1] %vm26, %v25
    %s28 = scalar_lea.vmem %s3, %s23
    %v29 = vld [vmem:[%s28] sm:$0x1]
    %30 = vst [vmem:[#allocation3] sm:$0x1] %v29
    %s31 = sadd.s32 %s22, 1
    %s32 = sld [smem:[#allocation5 + %s31]]
    %s33 = scalar_lea.vmem %s1, %s32
    %v34 = vld [vmem:[%s33] sm:$0x1]
    %35 = vst.msk [vmem:[#allocation2 + $0x1] sm:$0x1] %vm26, %v34
    %s36 = scalar_lea.vmem %s3, %s32
    %v37 = vld [vmem:[%s36] sm:$0x1]
    %38 = vst [vmem:[#allocation3 + $0x1] sm:$0x1] %v37
    %s39 = sadd.s32 %s22, 2
    %s40 = sld [smem:[#allocation5 + %s39]]
    %s41 = scalar_lea.vmem %s1, %s40
    %v42 = vld [vmem:[%s41] sm:$0x1]
    %43 = vst.msk [vmem:[#allocation2 + $0x2] sm:$0x1] %vm26, %v42
    %s44 = scalar_lea.vmem %s3, %s40
    %v45 = vld [vmem:[%s44] sm:$0x1]
    %46 = vst [vmem:[#allocation3 + $0x2] sm:$0x1] %v45
    %s47 = sadd.s32 %s22, 3
    %s48 = sld [smem:[#allocation5 + %s47]]
    %s49 = scalar_lea.vmem %s1, %s48
    %v50 = vld [vmem:[%s49] sm:$0x1]
    %51 = vst.msk [vmem:[#allocation2 + $0x3] sm:$0x1] %vm26, %v50
    %s52 = scalar_lea.vmem %s3, %s48
    %v53 = vld [vmem:[%s52] sm:$0x1]
    %54 = vst [vmem:[#allocation3 + $0x3] sm:$0x1] %v53
    %s55 = sadd.s32 %s22, 4
    %s56 = sld [smem:[#allocation5 + %s55]]
    %s57 = scalar_lea.vmem %s1, %s56
    %v58 = vld [vmem:[%s57] sm:$0x1]
    %59 = vst.msk [vmem:[#allocation2 + $0x4] sm:$0x1] %vm26, %v58
    %s60 = scalar_lea.vmem %s3, %s56
    %v61 = vld [vmem:[%s60] sm:$0x1]
    %62 = vst [vmem:[#allocation3 + $0x4] sm:$0x1] %v61
    %s63 = sadd.s32 %s22, 5
    %s64 = sld [smem:[#allocation5 + %s63]]
    %s65 = scalar_lea.vmem %s1, %s64
    %v66 = vld [vmem:[%s65] sm:$0x1]
    %67 = vst.msk [vmem:[#allocation2 + $0x5] sm:$0x1] %vm26, %v66
    %s68 = scalar_lea.vmem %s3, %s64
    %v69 = vld [vmem:[%s68] sm:$0x1]
    %70 = vst [vmem:[#allocation3 + $0x5] sm:$0x1] %v69
    %s71 = sadd.s32 %s22, 6
    %s72 = sld [smem:[#allocation5 + %s71]]
    %s73 = scalar_lea.vmem %s1, %s72
    %v74 = vld [vmem:[%s73] sm:$0x1]
    %75 = vst.msk [vmem:[#allocation2 + $0x6] sm:$0x1] %vm26, %v74
    %s76 = scalar_lea.vmem %s3, %s72
    %v77 = vld [vmem:[%s76] sm:$0x1]
    %78 = vst [vmem:[#allocation3 + $0x6] sm:$0x1] %v77
    %s79 = sadd.s32 %s22, 7
    %s80 = sld [smem:[#allocation5 + %s79]]
    %s81 = scalar_lea.vmem %s1, %s80
    %v82 = vld [vmem:[%s81] sm:$0x1]
    %83 = vst.msk [vmem:[#allocation2 + $0x7] sm:$0x1] %vm26, %v82
    %s84 = scalar_lea.vmem %s3, %s80
    %v85 = vld [vmem:[%s84] sm:$0x1]
    %86 = vst [vmem:[#allocation3 + $0x7] sm:$0x1] %v85
    %v87 = vld [vmem:[#allocation2] sm:$0xff]
    %v88 = vld [vmem:[%s2] sm:$0xff]
    %v89 = vld [vmem:[%s2 + $0x8] sm:$0xff]
    %v90 = vld [vmem:[%s2 + $0x10] sm:$0xff]
    %v91 = vld [vmem:[%s2 + $0x18] sm:$0xff]
    %v92 = vld [vmem:[%s2 + $0x20] sm:$0xff]
    %v93 = vld [vmem:[%s2 + $0x28] sm:$0xff]
    %v94 = vld [vmem:[%s2 + $0x30] sm:$0xff]
    %v95 = vld [vmem:[%s2 + $0x38] sm:$0xff]
    %v96 = vld [vmem:[%s2 + $0x40] sm:$0xff]
    %v97 = vld [vmem:[%s2 + $0x48] sm:$0xff]
    %v98 = vld [vmem:[%s2 + $0x50] sm:$0xff]
    %v99 = vld [vmem:[%s2 + $0x58] sm:$0xff]
    %v100 = vld [vmem:[%s2 + $0x60] sm:$0xff]
    %v101 = vld [vmem:[%s2 + $0x68] sm:$0xff]
    %v102 = vld [vmem:[%s2 + $0x70] sm:$0xff]
    %v103 = vld [vmem:[%s2 + $0x78] sm:$0xff]
    %vm104 = vcmask 261120
    %v106 = vsel %vm104, %v87, 0
    %v109 = vsel %vm104, %v88, 0
    %v112 = vsel %vm104, %v89, 0
    %v115 = vsel %vm104, %v90, 0
    %v118 = vsel %vm104, %v91, 0
    %v121 = vsel %vm104, %v92, 0
    %v124 = vsel %vm104, %v93, 0
    %v127 = vsel %vm104, %v94, 0
    %v130 = vsel %vm104, %v95, 0
    %v133 = vsel %vm104, %v96, 0
    %v136 = vsel %vm104, %v97, 0
    %v139 = vsel %vm104, %v98, 0
    %v142 = vsel %vm104, %v99, 0
    %v145 = vsel %vm104, %v100, 0
    %v148 = vsel %vm104, %v101, 0
    %v151 = vsel %vm104, %v102, 0
    %v154 = vsel %vm104, %v103, 0
    %156 = vmatprep.subr.mxu0 0.0
    %157 = vmatpush1.xpose.msra.mxu0 %v109
    %158 = vmatprep.subr.mxu0 0.0
    %159 = vmatpush1.xpose.msra.mxu0 %v112
    %160 = vmatprep.subr.mxu0 0.0
    %161 = vmatpush1.xpose.msra.mxu0 %v115
    %162 = vmatprep.subr.mxu0 0.0
    %163 = vmatpush1.xpose.msra.mxu0 %v118
    %164 = vmatprep.subr.mxu0 0.0
    %165 = vmatpush1.xpose.msra.mxu0 %v121
    %166 = vmatprep.subr.mxu0 0.0
    %167 = vmatpush1.xpose.msra.mxu0 %v124
    %168 = vmatprep.subr.mxu0 0.0
    %169 = vmatpush1.xpose.msra.mxu0 %v127
    %170 = vmatprep.subr.mxu0 0.0
    %171 = vmatpush1.xpose.msra.mxu0 %v130
    %172 = vmatprep.subr.mxu0 0.0
    %173 = vmatpush1.xpose.msra.mxu0 %v133
    %174 = vmatprep.subr.mxu0 0.0
    %175 = vmatpush1.xpose.msra.mxu0 %v136
    %176 = vmatprep.subr.mxu0 0.0
    %177 = vmatpush1.xpose.msra.mxu0 %v139
    %178 = vmatprep.subr.mxu0 0.0
    %179 = vmatpush1.xpose.msra.mxu0 %v142
    %180 = vmatprep.subr.mxu0 0.0
    %181 = vmatpush1.xpose.msra.mxu0 %v145
    %182 = vmatprep.subr.mxu0 0.0
    %183 = vmatpush1.xpose.msra.mxu0 %v148
    %184 = vmatprep.subr.mxu0 0.0
    %185 = vmatpush1.xpose.msra.mxu0 %v151
    %186 = vmatprep.subr.mxu0 0.0
    %187 = vmatpush1.xpose.msra.mxu0 %v154
    %188 = vmatprep.subr.mxu0 0.0
    %189 = vmatpush1.xpose.msra.mxu0 0.0
    %190 = vmatprep.subr.mxu0 0.0
    %191 = vmatpush1.xpose.msra.mxu0 0.0
    %192 = vmatprep.subr.mxu0 0.0
    %193 = vmatpush1.xpose.msra.mxu0 0.0
    %194 = vmatprep.subr.mxu0 0.0
    %195 = vmatpush1.xpose.msra.mxu0 0.0
    %196 = vmatprep.subr.mxu0 0.0
    %197 = vmatpush1.xpose.msra.mxu0 0.0
    %198 = vmatprep.subr.mxu0 0.0
    %199 = vmatpush1.xpose.msra.mxu0 0.0
    %200 = vmatprep.subr.mxu0 0.0
    %201 = vmatpush1.xpose.msra.mxu0 0.0
    %202 = vmatprep.subr.mxu0 0.0
    %203 = vmatpush1.xpose.msra.mxu0 0.0
    %204 = vmatprep.subr.mxu0 0.0
    %205 = vmatpush1.xpose.msra.mxu0 0.0
    %206 = vmatprep.subr.mxu0 0.0
    %207 = vmatpush1.xpose.msra.mxu0 0.0
    %208 = vmatprep.subr.mxu0 0.0
    %209 = vmatpush1.xpose.msra.mxu0 0.0
    %210 = vmatprep.subr.mxu0 0.0
    %211 = vmatpush1.xpose.msra.mxu0 0.0
    %212 = vmatprep.subr.mxu0 0.0
    %213 = vmatpush1.xpose.msra.mxu0 0.0
    %214 = vmatprep.subr.mxu0 0.0
    %215 = vmatpush1.xpose.msra.mxu0 0.0
    %216 = vmatprep.subr.mxu0 0.0
    %217 = vmatpush1.xpose.msra.mxu0 0.0
    %218 = vmatprep.subr.mxu0 0.0
    %219 = vmatpush1.xpose.msra.mxu0 0.0
    %220 = vmatprep.mubr.f32.mxu0 0.0
    %221 = vmatmul.mubr.f32.gmra.mrb[0].mxu0 %v106
    %v222 = vpop.f32.mrb[0].mxu0
    %v223 = vadd.f32 0.0, %v222
    %v224 = vpop.f32.mrb[0].mxu0
    %225 = vdwg.mxu0
    %v226 = vmul.f32 %v223, %v223
    %227 = vadd.xlane.f32.xlu0 %v226
    %v228 = vpop.xlane.xlu0 %227
    %v229 = vmax.f32 %v228, 1e-24
    %v230 = vrsqrt.pop %v229
    %v231 = vmul.f32 %v223, %v230
    %v232 = vld [vmem:[#allocation3] sm:$0xff]
    %v233 = vadd.f32 %v231, %v232
    %234 = vmax.xlane.f32.xlu0 %v233
    %v235 = vpop.xlane.xlu0 %234
    %v236 = vsub.f32 %v233, %v235
    %v237 = vmul.f32 %v236, 1.442695
    %v238 = vpow.pop %v237
    %239 = vadd.xlane.f32.xlu0 %v238
    %v240 = vpop.xlane.xlu0 %239
    %v241 = vrcp.pop %v240
    %v242 = vmul.f32 %v238, %v241
    %243 = vst [vmem:[#allocation6] sm:$0xff] %v242
    // Predicated region
    $region14: #{tpu_custom_call.1} parent=1 // pred_check
      _
    $region15: #{tpu_custom_call.1} parent=1 // pred_check_branch
      %245 = sbr.rel (0) target = $region17
    $region16: #{tpu_custom_call.1} parent=1 // pred_region
      %s247 = ssub.s32 128, 128
      %248 = vsyncadd [#allocation7], %s247
      %s250 = sshll.u32 [#allocation6], 4
      %s251 = int_to_ptr.vmem [resolvable:$true] %s250
      %253 = dma.vmem_to_hbm [thread:$0]  %s251, 128, %s4, [#allocation7]
    $region17: #{tpu_custom_call.1} parent=1 // pred_fallthru
      _
    // Predicated region
    $region18: #{tpu_custom_call.1} parent=1 // pred_check
      _
    $region19: #{tpu_custom_call.1} parent=1 // pred_check_branch
      %255 = sbr.rel (0) target = $region21
    $region20: #{tpu_custom_call.1} parent=1 // pred_region
      %256 = dma.done [#allocation7], 128
    $region21: #{tpu_custom_call.1} parent=1 // pred_fallthru
      _
    %257 = vsyncpa [#allocation7], 1

</llo_original>
